<compile_context>
chip_gen: v7x
topology: tpu7x:2x2x1
jax: 0.10.0
libtpu: 0.0.40
codegen_flags: <defaults>
</compile_context>

<pallas_src>
import functools

import jax
import jax.numpy as jnp
from jax.experimental import pallas as pl
from jax.experimental.pallas import tpu as pltpu


def _round_up(x, m):
    return (x + m - 1) // m * m


def _chip_config():
    """Returns (scoped-VMEM budget, per-step block target, min grid steps)."""
    try:
        kind = jax.devices()[0].device_kind.lower()
    except Exception:
        kind = ""
    if "v2" in kind or "v3" in kind:
        return 12 << 20, 2 << 20, 2
    if "v7" in kind:
        # 64 MiB physical VMEM; 2 TensorCores -> keep >= 4 grid steps so the
        # ("parallel",) batch axis can be sharded across both cores.
        return 48 << 20, 6 << 20, 4
    if "v4" in kind or "v5" in kind or "v6" in kind:
        # 128 MiB physical VMEM, single TensorCore.
        return 100 << 20, 8 << 20, 2
    return 32 << 20, 4 << 20, 4


def _compiler_params(semantics, need_bytes, vmem_cap):
    # Raise the scoped-VMEM limit above the most conservative default only
    # when the per-step working set actually needs it.
    limit = None
    if need_bytes > (12 << 20):
        limit = int(min(vmem_cap, _round_up(need_bytes + (4 << 20), 1 << 20)))
    return pltpu.CompilerParams(dimension_semantics=semantics,
                                vmem_limit_bytes=limit)


# ------------------------------ in-kernel helpers -----------------------------

def _pad_cols(v, cols):
    """Zero-pad the last (lane) dim of a small 2-D value up to `cols`."""
    if v.shape[-1] == cols:
        return v
    zeros = jnp.zeros((v.shape[0], cols - v.shape[-1]), v.dtype)
    return jnp.concatenate([v, zeros], axis=-1)


def _excite(pooled, w1_ref, b1_ref, w2_ref, b2_ref, c):
    """Tiny 2-layer MLP + sigmoid: (tb, C_pad) f32 -> (tb, c) f32."""
    h = jnp.dot(pooled, w1_ref[...], preferred_element_type=jnp.float32)
    h = jnp.maximum(h + b1_ref[...], 0.0)
    s = jnp.dot(h, w2_ref[...], preferred_element_type=jnp.float32)
    s = jax.nn.sigmoid(s + b2_ref[...])
    return s[:, :c] if s.shape[-1] != c else s


# ----------------------------------- kernels ----------------------------------

def _se_fused_kernel(x_ref, w1_ref, b1_ref, w2_ref, b2_ref, o_ref,
                     *, inv_hw, c_pad):
    """Single pass: pool -> FC1 -> ReLU -> FC2 -> sigmoid -> scale.

    x_ref / o_ref: (TB, C, HW) blocks (C/HW are the full array dims, so no
    padding of x is needed).  Weights use constant index maps and stay
    VMEM-resident across the whole grid.
    """
    # Squeeze: global average pool over the HW lane dim, f32 accumulation.
    pooled = jnp.sum(x_ref[...].astype(jnp.float32), axis=-1) * inv_hw
    pooled = _pad_cols(pooled, c_pad)
    # Excite: negligible next to the streaming traffic (per review, untuned).
    s = _excite(pooled, w1_ref, b1_ref, w2_ref, b2_ref, x_ref.shape[1])
    s = s.astype(o_ref.dtype)            # cast BEFORE the broadcast multiply
    # Re-read x_ref for the final scale so the big tile is not kept live
    # across the FC chain (load -> mul -> store with low vreg pressure).
    o_ref[...] = x_ref[...] * s[:, :, None]


def _se_excite_kernel(x_ref, w1_ref, b1_ref, w2_ref, b2_ref, s_ref, acc_ref,
                      *, inv_hw, c_pad, hw, thw):
    """Split path, pass A: HW-tiled global-average-pool + excitation MLP.

    x_ref: (TB, C, THW), s_ref: (TB, C, 1), acc_ref: (TB, C) f32 scratch.
    Grid = (batch tiles [parallel], HW tiles [arbitrary]).
    """
    k = pl.program_id(1)

    @pl.when(k == 0)
    def _init():
        acc_ref[...] = jnp.zeros_like(acc_ref)

    x = x_ref[...].astype(jnp.float32)
    if hw % thw:   # static: last HW block is partial -> mask padding columns
        col = k * thw + jax.lax.broadcasted_iota(jnp.int32, x.shape, 2)
        x = jnp.where(col < hw, x, 0.0)
    acc_ref[...] += jnp.sum(x, axis=-1)

    @pl.when(k == pl.num_programs(1) - 1)
    def _finalize():
        pooled = _pad_cols(acc_ref[...] * inv_hw, c_pad)
        s = _excite(pooled, w1_ref, b1_ref, w2_ref, b2_ref, x_ref.shape[1])
        s_ref[...] = s[:, :, None]


def _se_scale_kernel(x_ref, s_ref, o_ref):
    """Split path, pass B: out = x * s (broadcast over the HW lane dim)."""
    o_ref[...] = x_ref[...] * s_ref[...].astype(x_ref.dtype)


# ----------------------------------- wrapper ----------------------------------

def sq_ex_block(x, w1, b1, w2, b2, *, force_path=None):
    """Squeeze-and-Excitation forward.

    x : (N, C, H, W)
    w1: (C, C//r), b1: (C//r,)   (nn.Linear weights passed as (in, out),
    w2: (C//r, C), b2: (C,)       i.e. PyTorch `linear.weight.T`)
    force_path: None (auto) | "fused" | "split"  (testing knob; "fused" may
    exceed the VMEM budget for very large samples).
    """
    x = jnp.asarray(x)
    N, C, H, W = x.shape
    HW = H * W
    Cr = w1.shape[-1]
    inv_hw = 1.0 / float(HW)
    itemsize = jnp.dtype(x.dtype).itemsize
    vmem_cap, target_block, min_steps = _chip_config()
    budget = int(0.75 * vmem_cap)

    # Only the tiny FC weights are padded (8-aligned dims, cheap). x itself
    # is never padded or sliced — that was the dominant cost before.
    C_p, Cr_p = _round_up(C, 8), _round_up(Cr, 8)
    f32 = jnp.float32
    w1p = jnp.pad(jnp.asarray(w1, f32), ((0, C_p - C), (0, Cr_p - Cr)))
    b1p = jnp.pad(jnp.asarray(b1, f32).reshape(1, Cr), ((0, 0), (0, Cr_p - Cr)))
    w2p = jnp.pad(jnp.asarray(w2, f32), ((0, Cr_p - Cr), (0, C_p - C)))
    b2p = jnp.pad(jnp.asarray(b2, f32).reshape(1, C), ((0, 0), (0, C_p - C)))
    w_bytes = 4 * int(w1p.size + b1p.size + w2p.size + b2p.size)

    x_flat = x.reshape(N, C, HW)          # metadata-only, no HBM copy

    # Internal VMEM footprint of one sample's (C, HW) slab (Mosaic pads the
    # last two block dims up to full (sublane, lane) tiles inside VMEM).
    sub = {1: 32, 2: 16}.get(itemsize, 8)
    c_i = _round_up(C, sub)
    hw_i = _round_up(HW, 128)
    sample_vmem = c_i * hw_i * itemsize

    # Batch tile: as large as the per-step target allows, while keeping at
    # least `min_steps` grid steps when the batch size permits.
    tb = max(1, min(N,
                    max(1, target_block // max(sample_vmem, 1)),
                    -(-N // min_steps)))

    def fused_need(t):                    # in + out blocks, double-buffered
        return 4 * t * sample_vmem + 2 * w_bytes + (1 << 20)

    while tb > 1 and fused_need(tb) > budget:
        tb = max(1, tb // 2)

    use_fused = fused_need(tb) <= budget
    if force_path == "fused":
        use_fused = True                  # test knob; may exceed VMEM budget
    elif force_path == "split":
        use_fused = False

    weight_specs = [
        pl.BlockSpec((C_p, Cr_p), lambda *_: (0, 0)),
        pl.BlockSpec((1, Cr_p), lambda *_: (0, 0)),
        pl.BlockSpec((Cr_p, C_p), lambda *_: (0, 0)),
        pl.BlockSpec((1, C_p), lambda *_: (0, 0)),
    ]

    if use_fused:
        # NOTE(v7x): a 1-D ("parallel",) grid with >= min_steps (=4) steps is
        # relied on to shard batch tiles across both TensorCores.
        out = pl.pallas_call(
            functools.partial(_se_fused_kernel, inv_hw=inv_hw, c_pad=C_p),
            out_shape=jax.ShapeDtypeStruct((N, C, HW), x.dtype),
            grid_spec=pltpu.PrefetchScalarGridSpec(
                num_scalar_prefetch=0,
                grid=(pl.cdiv(N, tb),),
                in_specs=[pl.BlockSpec((tb, C, HW), lambda n: (n, 0, 0))]
                         + weight_specs,
                out_specs=pl.BlockSpec((tb, C, HW), lambda n: (n, 0, 0)),
            ),
            compiler_params=_compiler_params(("parallel",), fused_need(tb),
                                             vmem_cap),
        )(x_flat, w1p, b1p, w2p, b2p)
        return out.reshape(N, C, H, W)

    # ------------------ split (VMEM-safe) fallback path ----------------------
    # Pass A: HW-tiled pooling + excitation MLP -> s (N, C, 1).
    # Pass B: out = x * s.  3x HBM traffic but bounded VMEM.
    while tb > 1 and 4 * tb * c_i * 128 * itemsize + 2 * w_bytes > budget:
        tb = max(1, tb // 2)
    split_target = max(1 << 20, target_block // 2)     # ~3-4 MiB x blocks
    hw_cap = _round_up(HW, 128)
    thw = 128
    while thw * 2 <= hw_cap and tb * c_i * (thw * 2) * itemsize <= split_target:
        thw *= 2
    while thw > 128 and 4 * tb * c_i * thw * itemsize + 2 * w_bytes > budget:
        thw //= 2
    blk_bytes = tb * c_i * thw * itemsize
    n_blocks = pl.cdiv(N, tb)
    k_blocks = pl.cdiv(HW, thw)

    excite_need = 2 * blk_bytes + 2 * w_bytes + (1 << 20)
    s = pl.pallas_call(
        functools.partial(_se_excite_kernel, inv_hw=inv_hw, c_pad=C_p,
                          hw=HW, thw=thw),
        out_shape=jax.ShapeDtypeStruct((N, C, 1), jnp.float32),
        grid_spec=pltpu.PrefetchScalarGridSpec(
            num_scalar_prefetch=0,
            grid=(n_blocks, k_blocks),
            in_specs=[pl.BlockSpec((tb, C, thw), lambda n, k: (n, 0, k))]
                     + weight_specs,
            out_specs=pl.BlockSpec((tb, C, 1), lambda n, k: (n, 0, 0)),
            scratch_shapes=[pltpu.VMEM((tb, C), jnp.float32)],
        ),
        compiler_params=_compiler_params(("parallel", "arbitrary"),
                                         excite_need, vmem_cap),
    )(x_flat, w1p, b1p, w2p, b2p)

    scale_need = 4 * blk_bytes + (1 << 20)
    out = pl.pallas_call(
        _se_scale_kernel,
        out_shape=jax.ShapeDtypeStruct((N, C, HW), x.dtype),
        grid_spec=pltpu.PrefetchScalarGridSpec(
            num_scalar_prefetch=0,
            grid=(n_blocks, k_blocks),
            in_specs=[
                pl.BlockSpec((tb, C, thw), lambda n, k: (n, 0, k)),
                pl.BlockSpec((tb, C, 1), lambda n, k: (n, 0, 0)),
            ],
            out_specs=pl.BlockSpec((tb, C, thw), lambda n, k: (n, 0, k)),
        ),
        compiler_params=_compiler_params(("parallel", "parallel"),
                                         scale_need, vmem_cap),
    )(x_flat, s)
    return out.reshape(N, C, H, W)


def sq_ex_block_ref(x, w1, b1, w2, b2):
    """Pure-JAX reference mirroring the PyTorch forward."""
    pooled = x.reshape(*x.shape[:-2], -1).mean(-1)           # (N, C)
    h = jnp.maximum(pooled @ w1 + b1, 0.0)                    # (N, C//r)
    s = jax.nn.sigmoid(h @ w2 + b2)                           # (N, C)
    return x * s[:, :, None, None]


if __name__ == "__main__":
    key = jax.random.PRNGKey(0)

    def make_case(k, n, c, h, w, r):
        kx, k1, k2, k3, k4 = jax.random.split(k, 5)
        cr = c // r
        xx = jax.random.normal(kx, (n, c, h, w), dtype=jnp.float32)
        ww1 = jax.random.normal(k1, (c, cr), dtype=jnp.float32) * 0.5
        bb1 = jax.random.normal(k2, (cr,), dtype=jnp.float32) * 0.1
        ww2 = jax.random.normal(k3, (cr, c), dtype=jnp.float32) * 0.5
        bb2 = jax.random.normal(k4, (c,), dtype=jnp.float32) * 0.1
        return xx, ww1, bb1, ww2, bb2

    ka, kb = jax.random.split(key)

    # Shapes consistent with the module: batch=2, in_ch=4, H=W=16, r=2.
    args = make_case(ka, 2, 4, 16, 16, 2)
    ref = sq_ex_block_ref(*args)
    out = jax.block_until_ready(sq_ex_block(*args))            # fused path
    assert out.shape == args[0].shape
    assert jnp.allclose(out, ref, atol=1e-5, rtol=1e-5)
    out_split = jax.block_until_ready(
        sq_ex_block(*args, force_path="split"))                # split path
    assert jnp.allclose(out_split, ref, atol=1e-5, rtol=1e-5)

    # Non-128-multiple spatial size + batch tail: exercises the pad-free
    # full-dim blocks and the in-kernel HW-tail mask of the split path.
    args2 = make_case(kb, 3, 4, 7, 7, 2)
    ref2 = sq_ex_block_ref(*args2)
    out2 = jax.block_until_ready(sq_ex_block(*args2))
    assert jnp.allclose(out2, ref2, atol=1e-5, rtol=1e-5)
    out2_split = jax.block_until_ready(
        sq_ex_block(*args2, force_path="split"))
    assert jnp.allclose(out2_split, ref2, atol=1e-5, rtol=1e-5)

    print("KERNEL_OK")
</pallas_src>

<mosaic_0001>
module attributes {stable_mosaic.version = 11 : i64} {
  func.func @_se_fused_kernel(%arg0: i32, %arg1: memref<1x4x256xf32, #tpu.memory_space<vmem>>, %arg2: memref<8x8xf32, #tpu.memory_space<vmem>>, %arg3: memref<1x8xf32, #tpu.memory_space<vmem>>, %arg4: memref<8x8xf32, #tpu.memory_space<vmem>>, %arg5: memref<1x8xf32, #tpu.memory_space<vmem>>, %arg6: memref<1x4x256xf32, #tpu.memory_space<vmem>>) attributes {dimension_semantics = [#tpu.dimension_semantics<parallel>], iteration_bounds = array<i64: 2>, scalar_prefetch = 0 : i64, scratch_operands = 0 : i64, tpu.core_type = #tpu.core_type<tc>, window_params = [{transform_indices = @transform_0, window_bounds = array<i64: 1, 4, 256>}, {pipeline_mode = #tpu.pipeline_mode<synchronous>, transform_indices = @transform_1, window_bounds = array<i64: 8, 8>}, {pipeline_mode = #tpu.pipeline_mode<synchronous>, transform_indices = @transform_2, window_bounds = array<i64: 1, 8>}, {pipeline_mode = #tpu.pipeline_mode<synchronous>, transform_indices = @transform_3, window_bounds = array<i64: 8, 8>}, {pipeline_mode = #tpu.pipeline_mode<synchronous>, transform_indices = @transform_4, window_bounds = array<i64: 1, 8>}, {transform_indices = @transform_5, window_bounds = array<i64: 1, 4, 256>}]} {
    %c0 = arith.constant 0 : index
    %c0_0 = arith.constant 0 : index
    %c0_1 = arith.constant 0 : index
    %0 = vector.load %arg1[%c0, %c0_0, %c0_1] : memref<1x4x256xf32, #tpu.memory_space<vmem>>, vector<1x4x256xf32>
    %cst = arith.constant dense<0.000000e+00> : vector<1x4xf32>
    %1 = vector.multi_reduction <add>, %0, %cst [2] : vector<1x4x256xf32> to vector<1x4xf32>
    %cst_2 = arith.constant 3.906250e-03 : f32
    %2 = vector.broadcast %cst_2 : f32 to vector<1x4xf32>
    %3 = arith.mulf %1, %2 : vector<1x4xf32>
    %cst_3 = arith.constant 0.000000e+00 : f32
    %4 = vector.broadcast %cst_3 : f32 to vector<1x4xf32>
    %5 = tpu.concatenate %3, %4 in 1 : vector<1x4xf32>, vector<1x4xf32> -> vector<1x8xf32>
    %c0_4 = arith.constant 0 : index
    %c0_5 = arith.constant 0 : index
    %6 = vector.load %arg2[%c0_4, %c0_5] : memref<8x8xf32, #tpu.memory_space<vmem>>, vector<8x8xf32>
    %cst_6 = arith.constant dense<0.000000e+00> : vector<1x8xf32>
    %7 = tpu.matmul %5, %6, %cst_6 {dimension_numbers = #tpu.dot_dimension_numbers<[1], [0], [0], [1], [0, 0, 1, 1], [], []>} : vector<1x8xf32>, vector<8x8xf32>, vector<1x8xf32> -> vector<1x8xf32>
    %c0_7 = arith.constant 0 : index
    %c0_8 = arith.constant 0 : index
    %8 = vector.load %arg3[%c0_7, %c0_8] : memref<1x8xf32, #tpu.memory_space<vmem>>, vector<1x8xf32>
    %9 = arith.addf %7, %8 : vector<1x8xf32>
    %cst_9 = arith.constant 0.000000e+00 : f32
    %10 = vector.broadcast %cst_9 : f32 to vector<1x8xf32>
    %11 = arith.maximumf %9, %10 : vector<1x8xf32>
    %c0_10 = arith.constant 0 : index
    %c0_11 = arith.constant 0 : index
    %12 = vector.load %arg4[%c0_10, %c0_11] : memref<8x8xf32, #tpu.memory_space<vmem>>, vector<8x8xf32>
    %cst_12 = arith.constant dense<0.000000e+00> : vector<1x8xf32>
    %13 = tpu.matmul %11, %12, %cst_12 {dimension_numbers = #tpu.dot_dimension_numbers<[1], [0], [0], [1], [0, 0, 1, 1], [], []>} : vector<1x8xf32>, vector<8x8xf32>, vector<1x8xf32> -> vector<1x8xf32>
    %c0_13 = arith.constant 0 : index
    %c0_14 = arith.constant 0 : index
    %14 = vector.load %arg5[%c0_13, %c0_14] : memref<1x8xf32, #tpu.memory_space<vmem>>, vector<1x8xf32>
    %15 = arith.addf %13, %14 : vector<1x8xf32>
    %16 = arith.negf %15 : vector<1x8xf32>
    %17 = math.exp %16 : vector<1x8xf32>
    %cst_15 = arith.constant 1.000000e+00 : f32
    %18 = vector.broadcast %cst_15 : f32 to vector<1x8xf32>
    %19 = arith.addf %18, %17 : vector<1x8xf32>
    %20 = arith.divf %18, %19 : vector<1x8xf32>
    %21 = vector.extract_strided_slice %20 {offsets = [0, 0], sizes = [1, 4], strides = [1, 1]} : vector<1x8xf32> to vector<1x4xf32>
    %c0_16 = arith.constant 0 : index
    %c0_17 = arith.constant 0 : index
    %c0_18 = arith.constant 0 : index
    %22 = vector.load %arg1[%c0_16, %c0_17, %c0_18] : memref<1x4x256xf32, #tpu.memory_space<vmem>>, vector<1x4x256xf32>
    %23 = vector.shape_cast %21 : vector<1x4xf32> to vector<1x4x1xf32>
    %24 = vector.broadcast %23 : vector<1x4x1xf32> to vector<1x4x256xf32>
    %25 = arith.mulf %22, %24 : vector<1x4x256xf32>
    %c0_19 = arith.constant 0 : index
    %c0_20 = arith.constant 0 : index
    %c0_21 = arith.constant 0 : index
    %26 = vector.load %arg6[%c0_19, %c0_20, %c0_21] : memref<1x4x256xf32, #tpu.memory_space<vmem>>, vector<1x4x256xf32>
    tpu.vector_store %arg6[%c0_19, %c0_20, %c0_21], %25 {strides = array<i32>} : memref<1x4x256xf32, #tpu.memory_space<vmem>>, vector<1x4x256xf32>,
    return
  }
  func.func @transform_0(%arg0: i32) -> (i32, i32, i32) {
    %c0_i32 = arith.constant 0 : i32
    %c0_i32_0 = arith.constant 0 : i32
    %c0_i32_1 = arith.constant 0 : i32
    return %arg0, %c0_i32, %c0_i32_0 : i32, i32, i32
  }
  func.func @transform_1(%arg0: i32) -> (i32, i32) {
    %c0_i32 = arith.constant 0 : i32
    %c0_i32_0 = arith.constant 0 : i32
    %c0_i32_1 = arith.constant 0 : i32
    return %c0_i32, %c0_i32_0 : i32, i32
  }
  func.func @transform_2(%arg0: i32) -> (i32, i32) {
    %c0_i32 = arith.constant 0 : i32
    %c0_i32_0 = arith.constant 0 : i32
    %c0_i32_1 = arith.constant 0 : i32
    return %c0_i32, %c0_i32_0 : i32, i32
  }
  func.func @transform_3(%arg0: i32) -> (i32, i32) {
    %c0_i32 = arith.constant 0 : i32
    %c0_i32_0 = arith.constant 0 : i32
    %c0_i32_1 = arith.constant 0 : i32
    return %c0_i32, %c0_i32_0 : i32, i32
  }
  func.func @transform_4(%arg0: i32) -> (i32, i32) {
    %c0_i32 = arith.constant 0 : i32
    %c0_i32_0 = arith.constant 0 : i32
    %c0_i32_1 = arith.constant 0 : i32
    return %c0_i32, %c0_i32_0 : i32, i32
  }
  func.func @transform_5(%arg0: i32) -> (i32, i32, i32) {
    %c0_i32 = arith.constant 0 : i32
    %c0_i32_0 = arith.constant 0 : i32
    %c0_i32_1 = arith.constant 0 : i32
    return %arg0, %c0_i32, %c0_i32_0 : i32, i32, i32
  }
}

</mosaic_0001>

<llo_original>
// kernel: tpu_custom_call.1
$region0: #{tpu_custom_call.1}
  #allocation0 [shape = 'u32[]', space=smem, size = 0x4, offset = 0x4, fixed_abs, tag = 'smem constant byte address 0x4 - core index']
  #allocation1 [shape = 'u32[144,128]{1,0:T(1,128)}', space=vmem, size = 0x12000, scoped, tag = 'internal scratch']
  %s0 = inlined_call_operand.hbm [shape: f32[2,4,256], index: 0, kind: input, shape index: {}]
  %s1 = inlined_call_operand.hbm [shape: f32[8,8], index: 1, kind: input, shape index: {}]
  %s2 = inlined_call_operand.vmem [shape: f32[1,8], index: 2, kind: input, shape index: {}]
  %s3 = inlined_call_operand.vmem [shape: f32[8,8], index: 3, kind: input, shape index: {}]
  %s4 = inlined_call_operand.vmem [shape: f32[1,8], index: 4, kind: input, shape index: {}]
  %s5 = inlined_call_operand.hbm [shape: f32[2,4,256], index: 5, kind: output, shape index: {}]
  %s6 = sld [smem:[#allocation0]]
  $region61: #{tpu_custom_call.1} parent=0
    _
  %s8 = ssub.s32 1, %s6
  %s9 = scalar_select 0, %s8, %s6
  $region1: #{tpu_custom_call.1} parent=0
    #allocation2 [shape = 'u8[8192]{0}', space=vmem, size = 0x2000, scoped, tag = 'input window, operand 0']
    #allocation3 [shape = 's32[2]{0}', space=sflag, size = 0x8, scoped, tag = 'scoped memory for tpu_custom_call.1']
    #allocation4 [shape = 's32[2]{0}', space=sflag, size = 0x8, scoped, tag = 'scoped memory for tpu_custom_call.1']
    #allocation5 [shape = 'u8[4096]{0}', space=vmem, size = 0x1000, scoped, tag = 'input window, operand 1, single buffered']
    #allocation6 [shape = 's32[1]{0}', space=sflag, size = 0x4, scoped, tag = 'scoped memory for tpu_custom_call.1']
    #allocation7 [shape = 'u8[8192]{0}', space=vmem, size = 0x2000, scoped, tag = 'output window, operand 0']
    %10 = vsyncpa [#allocation3], 0
    %s11 = scalar_lea.sflag [#allocation3], 1
    %12 = vsyncpa %s11, 0
    %13 = vsyncpa [#allocation6], 0
    %14 = vsyncpa [#allocation4], 0
    %s15 = scalar_lea.sflag [#allocation4], 1
    %16 = vsyncpa %s15, 0
    loop: start=0, step=1, limit=4
    $region2: #{tpu_custom_call.1} parent=1 // loop_pre_header
      _
    $region3: #{tpu_custom_call.1} parent=1 // loop_header
      %s18 = sphi 0, %s22
      %p19 = scmp.ge.s32.totalorder %s18, 4
      %s28 = sphi 0, %s30
      %s31 = sphi 0, %s28
      %s32 = sphi 0, %s31
      %s48 = sphi 0, %s32
      %s52 = sphi 0, %s52
      %s54 = sphi 0, %s52
      %s55 = sphi 0, %s54
      %s69 = sphi 0, %s55
      %s73 = sphi 0, %s73
      %s75 = sphi 0, %s73
      %s76 = sphi 0, %s75
      %s90 = sphi 0, %s76
      %s94 = sphi 0, %s94
      %s96 = sphi 0, %s94
      %s97 = sphi 0, %s96
      %s111 = sphi 0, %s97
      %s115 = sphi 0, %s115
      %s117 = sphi 0, %s115
      %s118 = sphi 0, %s117
      %s132 = sphi 0, %s118
      %s138 = sphi 0, %s140
      %s141 = sphi 0, %s138
      %s142 = sphi 0, %s141
      %s158 = sphi 0, %s142
    $region4: #{tpu_custom_call.1} parent=1 // loop_header_branch
      %21 = sbr.rel (%p19) target = $region8
    $region5: #{tpu_custom_call.1} parent=1 // loop_body
      %s23 = ssub.s32 %s18, 1
      %s24 = ssub.s32 %s18, 2
      %s25 = sadd.s32 %s18, 1
      %s26 = ssub.s32 %s18, %s25
      %p27 = scmp.eq.s32.totalorder %s26, 0
      %s29 = sadd.s32 %s28, 1
      %s30 = scalar_select %p27, %s28, %s29
      %p33 = pneg %p27
      %p34 = scmp.eq.s32.totalorder %s18, 1
      %p35 = por %p33, %p34
      %p36 = scmp.ne.s32.totalorder %s28, %s31
      %p37 = scmp.eq.s32.totalorder %s18, 0
      %p38 = por %p36, %p37
      %p39 = scmp.ne.s32.totalorder %s28, %s31
      %p40 = scmp.eq.s32.totalorder %s23, 1
      %p41 = por %p39, %p40
      %p42 = scmp.ne.s32.totalorder %s31, %s32
      %p43 = scmp.eq.s32.totalorder %s23, 0
      %p44 = por %p42, %p43
      %p45 = scmp.ne.s32.totalorder %s31, %s32
      %p46 = scmp.eq.s32.totalorder %s24, 1
      %p47 = por %p45, %p46
      %p49 = scmp.ne.s32.totalorder %s32, %s48
      %p50 = scmp.eq.s32.totalorder %s24, 0
      %p51 = por %p49, %p50
      %s53 = sadd.s32 %s52, 1
      %p56 = scmp.eq.s32.totalorder %s18, 1
      %p57 = scmp.ne.s32.totalorder %s52, %s54
      %p58 = scmp.eq.s32.totalorder %s18, 0
      %p59 = por %p57, %p58
      %p60 = scmp.ne.s32.totalorder %s52, %s54
      %p61 = scmp.eq.s32.totalorder %s23, 1
      %p62 = por %p60, %p61
      %p63 = scmp.ne.s32.totalorder %s54, %s55
      %p64 = scmp.eq.s32.totalorder %s23, 0
      %p65 = por %p63, %p64
      %p66 = scmp.ne.s32.totalorder %s54, %s55
      %p67 = scmp.eq.s32.totalorder %s24, 1
      %p68 = por %p66, %p67
      %p70 = scmp.ne.s32.totalorder %s55, %s69
      %p71 = scmp.eq.s32.totalorder %s24, 0
      %p72 = por %p70, %p71
      %s74 = sadd.s32 %s73, 1
      %p77 = scmp.eq.s32.totalorder %s18, 1
      %p78 = scmp.ne.s32.totalorder %s73, %s75
      %p79 = scmp.eq.s32.totalorder %s18, 0
      %p80 = por %p78, %p79
      %p81 = scmp.ne.s32.totalorder %s73, %s75
      %p82 = scmp.eq.s32.totalorder %s23, 1
      %p83 = por %p81, %p82
      %p84 = scmp.ne.s32.totalorder %s75, %s76
      %p85 = scmp.eq.s32.totalorder %s23, 0
      %p86 = por %p84, %p85
      %p87 = scmp.ne.s32.totalorder %s75, %s76
      %p88 = scmp.eq.s32.totalorder %s24, 1
      %p89 = por %p87, %p88
      %p91 = scmp.ne.s32.totalorder %s76, %s90
      %p92 = scmp.eq.s32.totalorder %s24, 0
      %p93 = por %p91, %p92
      %s95 = sadd.s32 %s94, 1
      %p98 = scmp.eq.s32.totalorder %s18, 1
      %p99 = scmp.ne.s32.totalorder %s94, %s96
      %p100 = scmp.eq.s32.totalorder %s18, 0
      %p101 = por %p99, %p100
      %p102 = scmp.ne.s32.totalorder %s94, %s96
      %p103 = scmp.eq.s32.totalorder %s23, 1
      %p104 = por %p102, %p103
      %p105 = scmp.ne.s32.totalorder %s96, %s97
      %p106 = scmp.eq.s32.totalorder %s23, 0
      %p107 = por %p105, %p106
      %p108 = scmp.ne.s32.totalorder %s96, %s97
      %p109 = scmp.eq.s32.totalorder %s24, 1
      %p110 = por %p108, %p109
      %p112 = scmp.ne.s32.totalorder %s97, %s111
      %p113 = scmp.eq.s32.totalorder %s24, 0
      %p114 = por %p112, %p113
      %s116 = sadd.s32 %s115, 1
      %p119 = scmp.eq.s32.totalorder %s18, 1
      %p120 = scmp.ne.s32.totalorder %s115, %s117
      %p121 = scmp.eq.s32.totalorder %s18, 0
      %p122 = por %p120, %p121
      %p123 = scmp.ne.s32.totalorder %s115, %s117
      %p124 = scmp.eq.s32.totalorder %s23, 1
      %p125 = por %p123, %p124
      %p126 = scmp.ne.s32.totalorder %s117, %s118
      %p127 = scmp.eq.s32.totalorder %s23, 0
      %p128 = por %p126, %p127
      %p129 = scmp.ne.s32.totalorder %s117, %s118
      %p130 = scmp.eq.s32.totalorder %s24, 1
      %p131 = por %p129, %p130
      %p133 = scmp.ne.s32.totalorder %s118, %s132
      %p134 = scmp.eq.s32.totalorder %s24, 0
      %p135 = por %p133, %p134
      %s136 = ssub.s32 %s18, %s25
      %p137 = scmp.eq.s32.totalorder %s136, 0
      %s139 = sadd.s32 %s138, 1
      %s140 = scalar_select %p137, %s138, %s139
      %p143 = pneg %p137
      %p144 = scmp.eq.s32.totalorder %s18, 1
      %p145 = por %p143, %p144
      %p146 = scmp.ne.s32.totalorder %s138, %s141
      %p147 = scmp.eq.s32.totalorder %s18, 0
      %p148 = por %p146, %p147
      %p149 = scmp.ne.s32.totalorder %s138, %s141
      %p150 = scmp.eq.s32.totalorder %s23, 1
      %p151 = por %p149, %p150
      %p152 = scmp.ne.s32.totalorder %s141, %s142
      %p153 = scmp.eq.s32.totalorder %s23, 0
      %p154 = por %p152, %p153
      %p155 = scmp.ne.s32.totalorder %s141, %s142
      %p156 = scmp.eq.s32.totalorder %s24, 1
      %p157 = por %p155, %p156
      %p159 = scmp.ne.s32.totalorder %s142, %s158
      %p160 = scmp.eq.s32.totalorder %s24, 0
      %p161 = por %p159, %p160
      %p162 = scmp.le.s32.totalorder 1, %s18
      %p163 = scmp.lt.s32.totalorder %s18, 3
      %p164 = pnand %p162, %p163
      %p165 = pneg %p164
      // Predicated region
      $region9: #{tpu_custom_call.1} parent=5 // pred_check
        _
      $region10: #{tpu_custom_call.1} parent=5 // pred_check_branch
        %167 = sbr.rel (%p164) target = $region12
      $region11: #{tpu_custom_call.1} parent=5 // pred_region
        %s168 = ssub.s32 %s18, 1
        // Predicated region
        $region13: #{tpu_custom_call.1} parent=11 // pred_check
          %p169 = pneg %p65
        $region14: #{tpu_custom_call.1} parent=11 // pred_check_branch
          %171 = sbr.rel (%p169) target = $region16
        $region15: #{tpu_custom_call.1} parent=11 // pred_region
          %s173 = ssub.s32 128, 128
          %174 = vsyncadd [#allocation6], %s173
          %s176 = sshll.u32 [#allocation5], 4
          %s177 = int_to_ptr.vmem [resolvable:$true] %s176
          %179 = dma.hbm_to_vmem [thread:$0]  %s1, 128, %s177, [#allocation6]
        $region16: #{tpu_custom_call.1} parent=11 // pred_fallthru
          _
        // Predicated region
        $region17: #{tpu_custom_call.1} parent=11 // pred_check
          %p180 = pneg %p86
        $region18: #{tpu_custom_call.1} parent=11 // pred_check_branch
          %182 = sbr.rel (%p180) target = $region20
        $region19: #{tpu_custom_call.1} parent=11 // pred_region
          _
        $region20: #{tpu_custom_call.1} parent=11 // pred_fallthru
          _
        // Predicated region
        $region21: #{tpu_custom_call.1} parent=11 // pred_check
          %p183 = pneg %p107
        $region22: #{tpu_custom_call.1} parent=11 // pred_check_branch
          %185 = sbr.rel (%p183) target = $region24
        $region23: #{tpu_custom_call.1} parent=11 // pred_region
          _
        $region24: #{tpu_custom_call.1} parent=11 // pred_fallthru
          _
        // Predicated region
        $region25: #{tpu_custom_call.1} parent=11 // pred_check
          %p186 = pneg %p128
        $region26: #{tpu_custom_call.1} parent=11 // pred_check_branch
          %188 = sbr.rel (%p186) target = $region28
        $region27: #{tpu_custom_call.1} parent=11 // pred_region
          _
        $region28: #{tpu_custom_call.1} parent=11 // pred_fallthru
          _
      $region12: #{tpu_custom_call.1} parent=5 // pred_fallthru
        _
      %p189 = scmp.lt.s32.totalorder %s18, 2
      // Predicated region
      $region29: #{tpu_custom_call.1} parent=5 // pred_check
        %p190 = pneg %p189
      $region30: #{tpu_custom_call.1} parent=5 // pred_check_branch
        %192 = sbr.rel (%p190) target = $region32
      $region31: #{tpu_custom_call.1} parent=5 // pred_region
        // Predicated region
        $region33: #{tpu_custom_call.1} parent=31 // pred_check
          %p193 = pneg %p38
        $region34: #{tpu_custom_call.1} parent=31 // pred_check_branch
          %195 = sbr.rel (%p193) target = $region36
        $region35: #{tpu_custom_call.1} parent=31 // pred_region
          %s196 = sand.u32 %s28, 1
          %s197 = scalar_lea.sflag [#allocation3], %s196
          %s198 = sand.u32 %s28, 1
          %s199 = smul.addr %s198, 8
          %s200 = scalar_lea.vmem [#allocation2], %s199
          %s202 = ssub.s32 128, 128
          %203 = vsyncadd %s197, %s202
          %s204 = smul.addr %s18, 2
          %s205 = smul.addr %s204, 64
          %s206 = scalar_lea.hbm %s0, %s205
          %s208 = sshll.u32 %s200, 4
          %s209 = int_to_ptr.vmem [resolvable:$true] %s208
          %211 = dma.hbm_to_vmem [thread:$0]  %s206, 128, %s209, %s197
        $region36: #{tpu_custom_call.1} parent=31 // pred_fallthru
          _
      $region32: #{tpu_custom_call.1} parent=5 // pred_fallthru
        _
      %p212 = scmp.le.s32.totalorder 1, %s18
      %p213 = scmp.lt.s32.totalorder %s18, 3
      %p214 = pnand %p212, %p213
      %p215 = pneg %p214
      // Predicated region
      $region37: #{tpu_custom_call.1} parent=5 // pred_check
        _
      $region38: #{tpu_custom_call.1} parent=5 // pred_check_branch
        %217 = sbr.rel (%p214) target = $region40
      $region39: #{tpu_custom_call.1} parent=5 // pred_region
        %s218 = ssub.s32 %s18, 1
        %s219 = sand.u32 %s31, 1
        %s220 = scalar_lea.sflag [#allocation3], %s219
        %s221 = sand.u32 %s31, 1
        %s222 = smul.addr %s221, 8
        %s223 = scalar_lea.vmem [#allocation2], %s222
        // Predicated region
        $region41: #{tpu_custom_call.1} parent=39 // pred_check
          %p224 = pneg %p44
        $region42: #{tpu_custom_call.1} parent=39 // pred_check_branch
          %226 = sbr.rel (%p224) target = $region44
        $region43: #{tpu_custom_call.1} parent=39 // pred_region
          %227 = dma.done %s220, 128
        $region44: #{tpu_custom_call.1} parent=39 // pred_fallthru
          _
        // Predicated region
        $region45: #{tpu_custom_call.1} parent=39 // pred_check
          %p228 = pneg %p65
        $region46: #{tpu_custom_call.1} parent=39 // pred_check_branch
          %230 = sbr.rel (%p228) target = $region48
        $region47: #{tpu_custom_call.1} parent=39 // pred_region
          %231 = dma.done [#allocation6], 128
        $region48: #{tpu_custom_call.1} parent=39 // pred_fallthru
          _
        %s232 = sand.u32 %s31, 1
        %s233 = scalar_lea.sflag [#allocation3], %s232
        %s234 = sand.u32 %s31, 1
        %s235 = smul.addr %s234, 8
        %s236 = scalar_lea.vmem [#allocation2], %s235
        %p237 = pneg %p44
        %p238 = pneg %p41
        %p239 = pneg %p65
        %p240 = pneg %p62
        %p241 = pneg %p86
        %p242 = pneg %p83
        %p243 = pneg %p107
        %p244 = pneg %p104
        %p245 = pneg %p128
        %p246 = pneg %p125
        %p247 = pneg %p154
        %p248 = pneg %p151
        %s249 = sand.u32 %s141, 1
        %s250 = scalar_lea.sflag [#allocation4], %s249
        %s251 = sand.u32 %s141, 1
        %s252 = smul.addr %s251, 8
        %s253 = scalar_lea.vmem [#allocation7], %s252
        %v254 = vld [vmem:[%s223] sm:$0xff]
        %v256 = vcombine.high %v254, %v254
        %vm258 = vcmask 1043456
        %v259 = vsel %vm258, %v254, 0.0
        %v260 = vsel %vm258, %v256, 0.0
        %v261 = vadd.f32 %v259, %v260
        %262 = vadd.xlane.f32.xlu0 %v261
        %v263 = vpop.xlane.xlu0 %262
        %v264 = vmul.f32 %v263, 0.00390625
        %v266 = vlaneseq
        %v267 = vand.u32 %v266, 127
        %v268 = vlaneseq
        %v269 = vshrl.u32 %v268, 7
        %v270 = vsub.s32 %v267, %v269
        %v271 = vrot.slane %v264, %v270
        %vm273 = vcmask 31744
        %v274 = vsel %vm273, %v271, 0.0
        %v275 = vld [vmem:[#allocation5] sm:$0xff]
        %v276 = vld [vmem:[%s2] sm:$0x1]
        %vm277 = vcmask 64512
        %v279 = vsel %vm277, %v274, 0
        %281 = vmatprep.subr.mxu0 0.0
        %282 = vmatpush1.msra.mxu0 %v275
        %283 = vmatprep.subr.mxu0 0.0
        %284 = vmatpush1.msra.mxu0 0.0
        %285 = vmatprep.subr.mxu0 0.0
        %286 = vmatpush1.msra.mxu0 0.0
        %287 = vmatprep.subr.mxu0 0.0
        %288 = vmatpush1.msra.mxu0 0.0
        %289 = vmatprep.subr.mxu0 0.0
        %290 = vmatpush1.msra.mxu0 0.0
        %291 = vmatprep.subr.mxu0 0.0
        %292 = vmatpush1.msra.mxu0 0.0
        %293 = vmatprep.subr.mxu0 0.0
        %294 = vmatpush1.msra.mxu0 0.0
        %295 = vmatprep.subr.mxu0 0.0
        %296 = vmatpush1.msra.mxu0 0.0
        %297 = vmatprep.subr.mxu0 0.0
        %298 = vmatpush1.msra.mxu0 0.0
        %299 = vmatprep.subr.mxu0 0.0
        %300 = vmatpush1.msra.mxu0 0.0
        %301 = vmatprep.subr.mxu0 0.0
        %302 = vmatpush1.msra.mxu0 0.0
        %303 = vmatprep.subr.mxu0 0.0
        %304 = vmatpush1.msra.mxu0 0.0
        %305 = vmatprep.subr.mxu0 0.0
        %306 = vmatpush1.msra.mxu0 0.0
        %307 = vmatprep.subr.mxu0 0.0
        %308 = vmatpush1.msra.mxu0 0.0
        %309 = vmatprep.subr.mxu0 0.0
        %310 = vmatpush1.msra.mxu0 0.0
        %311 = vmatprep.subr.mxu0 0.0
        %312 = vmatpush1.msra.mxu0 0.0
        %313 = vmatprep.subr.mxu0 0.0
        %314 = vmatpush1.msra.mxu0 0.0
        %315 = vmatprep.subr.mxu0 0.0
        %316 = vmatpush1.msra.mxu0 0.0
        %317 = vmatprep.subr.mxu0 0.0
        %318 = vmatpush1.msra.mxu0 0.0
        %319 = vmatprep.subr.mxu0 0.0
        %320 = vmatpush1.msra.mxu0 0.0
        %321 = vmatprep.subr.mxu0 0.0
        %322 = vmatpush1.msra.mxu0 0.0
        %323 = vmatprep.subr.mxu0 0.0
        %324 = vmatpush1.msra.mxu0 0.0
        %325 = vmatprep.subr.mxu0 0.0
        %326 = vmatpush1.msra.mxu0 0.0
        %327 = vmatprep.subr.mxu0 0.0
        %328 = vmatpush1.msra.mxu0 0.0
        %329 = vmatprep.subr.mxu0 0.0
        %330 = vmatpush1.msra.mxu0 0.0
        %331 = vmatprep.subr.mxu0 0.0
        %332 = vmatpush1.msra.mxu0 0.0
        %333 = vmatprep.subr.mxu0 0.0
        %334 = vmatpush1.msra.mxu0 0.0
        %335 = vmatprep.subr.mxu0 0.0
        %336 = vmatpush1.msra.mxu0 0.0
        %337 = vmatprep.subr.mxu0 0.0
        %338 = vmatpush1.msra.mxu0 0.0
        %339 = vmatprep.subr.mxu0 0.0
        %340 = vmatpush1.msra.mxu0 0.0
        %341 = vmatprep.subr.mxu0 0.0
        %342 = vmatpush1.msra.mxu0 0.0
        %343 = vmatprep.subr.mxu0 0.0
        %344 = vmatpush1.msra.mxu0 0.0
        %345 = vmatprep.mubr.f32.mxu0 0.0
        %346 = vmatmul.mubr.f32.gmra.mrb[0].mxu0 %v279
        %v347 = vpop.f32.mrb[0].mxu0
        %v348 = vadd.f32 %v276, %v347
        %v349 = vpop.f32.mrb[0].mxu0
        %350 = vdwg.mxu0
        %v351 = vmax.f32 %v348, 0.0
        %v352 = vld [vmem:[%s3] sm:$0xff]
        %v353 = vld [vmem:[%s4] sm:$0x1]
        %v355 = vsel %vm277, %v351, 0
        %357 = vmatprep.subr.mxu0 0.0
        %358 = vmatpush1.msra.mxu0 %v352
        %359 = vmatprep.subr.mxu0 0.0
        %360 = vmatpush1.msra.mxu0 0.0
        %361 = vmatprep.subr.mxu0 0.0
        %362 = vmatpush1.msra.mxu0 0.0
        %363 = vmatprep.subr.mxu0 0.0
        %364 = vmatpush1.msra.mxu0 0.0
        %365 = vmatprep.subr.mxu0 0.0
        %366 = vmatpush1.msra.mxu0 0.0
        %367 = vmatprep.subr.mxu0 0.0
        %368 = vmatpush1.msra.mxu0 0.0
        %369 = vmatprep.subr.mxu0 0.0
        %370 = vmatpush1.msra.mxu0 0.0
        %371 = vmatprep.subr.mxu0 0.0
        %372 = vmatpush1.msra.mxu0 0.0
        %373 = vmatprep.subr.mxu0 0.0
        %374 = vmatpush1.msra.mxu0 0.0
        %375 = vmatprep.subr.mxu0 0.0
        %376 = vmatpush1.msra.mxu0 0.0
        %377 = vmatprep.subr.mxu0 0.0
        %378 = vmatpush1.msra.mxu0 0.0
        %379 = vmatprep.subr.mxu0 0.0
        %380 = vmatpush1.msra.mxu0 0.0
        %381 = vmatprep.subr.mxu0 0.0
        %382 = vmatpush1.msra.mxu0 0.0
        %383 = vmatprep.subr.mxu0 0.0
        %384 = vmatpush1.msra.mxu0 0.0
        %385 = vmatprep.subr.mxu0 0.0
        %386 = vmatpush1.msra.mxu0 0.0
        %387 = vmatprep.subr.mxu0 0.0
        %388 = vmatpush1.msra.mxu0 0.0
        %389 = vmatprep.subr.mxu0 0.0
        %390 = vmatpush1.msra.mxu0 0.0
        %391 = vmatprep.subr.mxu0 0.0
        %392 = vmatpush1.msra.mxu0 0.0
        %393 = vmatprep.subr.mxu0 0.0
        %394 = vmatpush1.msra.mxu0 0.0
        %395 = vmatprep.subr.mxu0 0.0
        %396 = vmatpush1.msra.mxu0 0.0
        %397 = vmatprep.subr.mxu0 0.0
        %398 = vmatpush1.msra.mxu0 0.0
        %399 = vmatprep.subr.mxu0 0.0
        %400 = vmatpush1.msra.mxu0 0.0
        %401 = vmatprep.subr.mxu0 0.0
        %402 = vmatpush1.msra.mxu0 0.0
        %403 = vmatprep.subr.mxu0 0.0
        %404 = vmatpush1.msra.mxu0 0.0
        %405 = vmatprep.subr.mxu0 0.0
        %406 = vmatpush1.msra.mxu0 0.0
        %407 = vmatprep.subr.mxu0 0.0
        %408 = vmatpush1.msra.mxu0 0.0
        %409 = vmatprep.subr.mxu0 0.0
        %410 = vmatpush1.msra.mxu0 0.0
        %411 = vmatprep.subr.mxu0 0.0
        %412 = vmatpush1.msra.mxu0 0.0
        %413 = vmatprep.subr.mxu0 0.0
        %414 = vmatpush1.msra.mxu0 0.0
        %415 = vmatprep.subr.mxu0 0.0
        %416 = vmatpush1.msra.mxu0 0.0
        %417 = vmatprep.subr.mxu0 0.0
        %418 = vmatpush1.msra.mxu0 0.0
        %419 = vmatprep.subr.mxu0 0.0
        %420 = vmatpush1.msra.mxu0 0.0
        %421 = vmatprep.mubr.f32.mxu0 0.0
        %422 = vmatmul.mubr.f32.gmra.mrb[0].mxu0 %v355
        %v423 = vpop.f32.mrb[0].mxu0
        %v424 = vadd.f32 %v353, %v423
        %v425 = vpop.f32.mrb[0].mxu0
        %426 = vdwg.mxu0
        %v427 = vxor.u32 %v424, 2147483648
        %v428 = vmul.f32 %v427, 1.442695
        %v429 = vpow.pop %v428
        %v430 = vadd.f32 %v429, 1.0
        %v431 = vrcp.pop %v430
        %v432 = vmul.f32 1.0, %v431
        %v433 = vlaneseq
        %v434 = vshrl.u32 %v433, 7
        %v435 = vsub.s32 0, %v434
        %v436 = vrot.slane %v432, %v435
        %438 = vbcast.lane.b32.xlu0 %v436, 256
        %v439 = vpop.permute.xlu0 %438
        %v442 = vunpack.c.l.s4 839922192
        %v443 = vunpack.c.0.s8 %v442
        %v444 = vlaneseq
        %v445 = vshrl.u32 %v444, 7
        %v446 = vsub.s32 %v443, %v445
        %v447 = vrot.slane %v439, %v446
        %v449 = vmul.f32 %v254, %v447
        %450 = vst [vmem:[%s253] sm:$0xff] %v449
        %s451 = sand.u32 %s141, 1
        %s452 = scalar_lea.sflag [#allocation4], %s451
        %s453 = sand.u32 %s141, 1
        %s454 = smul.addr %s453, 8
        %s455 = scalar_lea.vmem [#allocation7], %s454
        // Predicated region
        $region49: #{tpu_custom_call.1} parent=39 // pred_check
          %p456 = pneg %p151
        $region50: #{tpu_custom_call.1} parent=39 // pred_check_branch
          %458 = sbr.rel (%p456) target = $region52
        $region51: #{tpu_custom_call.1} parent=39 // pred_region
          %s460 = ssub.s32 128, 128
          %461 = vsyncadd %s452, %s460
          %s462 = smul.addr %s23, 2
          %s463 = smul.addr %s462, 64
          %s464 = scalar_lea.hbm %s5, %s463
          %s466 = sshll.u32 %s455, 4
          %s467 = int_to_ptr.vmem [resolvable:$true] %s466
          %469 = dma.vmem_to_hbm [thread:$0]  %s467, 128, %s464, %s452
        $region52: #{tpu_custom_call.1} parent=39 // pred_fallthru
          _
      $region40: #{tpu_custom_call.1} parent=5 // pred_fallthru
        _
      %p470 = scmp.le.s32.totalorder 2, %s18
      // Predicated region
      $region53: #{tpu_custom_call.1} parent=5 // pred_check
        %p471 = pneg %p470
      $region54: #{tpu_custom_call.1} parent=5 // pred_check_branch
        %473 = sbr.rel (%p471) target = $region56
      $region55: #{tpu_custom_call.1} parent=5 // pred_region
        %s474 = ssub.s32 %s18, 2
        // Predicated region
        $region57: #{tpu_custom_call.1} parent=55 // pred_check
          %p475 = pneg %p157
        $region58: #{tpu_custom_call.1} parent=55 // pred_check_branch
          %477 = sbr.rel (%p475) target = $region60
        $region59: #{tpu_custom_call.1} parent=55 // pred_region
          %s478 = sand.u32 %s142, 1
          %s479 = scalar_lea.sflag [#allocation4], %s478
          %s480 = sand.u32 %s142, 1
          %s481 = smul.addr %s480, 8
          %s482 = scalar_lea.vmem [#allocation7], %s481
          %483 = dma.done %s479, 128
        $region60: #{tpu_custom_call.1} parent=55 // pred_fallthru
          _
      $region56: #{tpu_custom_call.1} parent=5 // pred_fallthru
        _
    $region6: #{tpu_custom_call.1} parent=1 // loop_footer
      %s22 = sadd.s32 1, %s18
    $region7: #{tpu_custom_call.1} parent=1 // loop_footer_branch
      %17 = sbr.rel target = $region3
    $region8: #{tpu_custom_call.1} parent=1 // loop_exit
      _
    %484 = vsyncpa [#allocation3], 1
    %s485 = scalar_lea.sflag [#allocation3], 1
    %486 = vsyncpa %s485, 1
    %487 = vsyncpa [#allocation6], 1
    %488 = vsyncpa [#allocation4], 1
    %s489 = scalar_lea.sflag [#allocation4], 1
    %490 = vsyncpa %s489, 1

</llo_original>
